<compile_context>
chip_gen: v6e
topology: v6e:2x2x1
jax: 0.10.0
libtpu: 0.0.40
codegen_flags: <defaults>
</compile_context>

<pallas_src>
import functools

import jax
import jax.numpy as jnp
from jax.experimental import pallas as pl
from jax.experimental.pallas import tpu as pltpu


def _label_smoothing_kernel(x_ref, t_ref, out_ref, *, confidence, smoothing,
                            batch, block_rows):
    x = x_ref[...].astype(jnp.float32)            # (TB, C)
    t = t_ref[...]                                # (TB, 1) int32
    C = x.shape[-1]

    # Numerically-stable logsumexp along the class (lane) axis.
    m = jnp.max(x, axis=-1, keepdims=True)                       # (TB, 1)
    sum_exp = jnp.sum(jnp.exp(x - m), axis=-1, keepdims=True)    # (TB, 1)
    lse = m + jnp.log(sum_exp)                                   # (TB, 1)

    # gather(dim=-1, index=target) realized as a one-hot masked reduction.
    col = jax.lax.broadcasted_iota(jnp.int32, x.shape, 1)
    onehot = (col == t).astype(jnp.float32)                      # (TB, C)
    x_t = jnp.sum(x * onehot, axis=-1, keepdims=True)            # (TB, 1)
    x_sum = jnp.sum(x, axis=-1, keepdims=True)                   # (TB, 1)

    # Fused label-smoothing loss (confidence + smoothing == 1):
    #   confidence*(lse - x_t) + smoothing*(lse - sum(x)/C)
    loss = lse - confidence * x_t - (smoothing / C) * x_sum      # (TB, 1)

    # Mask rows beyond the true batch size (padding of a ragged last tile).
    row = (pl.program_id(0) * block_rows
           + jax.lax.broadcasted_iota(jnp.int32, loss.shape, 0))
    loss = jnp.where(row < batch, loss, 0.0)

    # Lane-dense partial sum for this batch tile (whole 128-lane row).
    partial = jnp.sum(loss)
    out_ref[...] = jnp.full(out_ref.shape, partial, dtype=jnp.float32)


def label_smoothing_loss(x, target, smoothing=0.1, block_rows=None,
                         vmem_limit_bytes=None):
    """Forward of _LabelSmoothing: x (B, C) float logits, target (B,) int labels."""
    B, C = x.shape

    if block_rows is None:
        # ~2 MiB f32 per x tile (double-buffered by the pipeline), >= 8 rows,
        # multiple of 8 (f32 sublane).  Re-derive / shrink for v7x's 64 MiB VMEM
        # or huge C; for very large vocabularies a second (arbitrary) grid axis
        # over C with an online logsumexp would be the next step.
        block_rows = max(8, min(512, (2 << 20) // max(1, C * 4)))
        block_rows = max(8, (block_rows // 8) * 8)

    num_tiles = pl.cdiv(B, block_rows)
    b_padded = num_tiles * block_rows
    if b_padded != B:
        x = jnp.pad(x, ((0, b_padded - B), (0, 0)))
        target = jnp.pad(target, (0, b_padded - B))
    t2 = target.astype(jnp.int32).reshape(b_padded, 1)

    kernel = functools.partial(
        _label_smoothing_kernel,
        confidence=1.0 - smoothing,
        smoothing=smoothing,
        batch=B,
        block_rows=block_rows,
    )

    out = pl.pallas_call(
        kernel,
        out_shape=jax.ShapeDtypeStruct((1, num_tiles * 128), jnp.float32),
        grid=(num_tiles,),
        in_specs=[
            pl.BlockSpec((block_rows, C), lambda i: (i, 0)),   # x tile
            pl.BlockSpec((block_rows, 1), lambda i: (i, 0)),   # target tile
        ],
        out_specs=pl.BlockSpec((1, 128), lambda i: (0, i)),    # partial sums
        compiler_params=pltpu.CompilerParams(
            dimension_semantics=("parallel",),                  # 2x on v7x (2 TCs)
            vmem_limit_bytes=vmem_limit_bytes,
        ),
    )(x, t2)

    partials = out.reshape(num_tiles, 128)[:, 0]
    return jnp.sum(partials) / B


def _reference(x, target, smoothing=0.1):
    confidence = 1.0 - smoothing
    logprobs = jax.nn.log_softmax(x.astype(jnp.float32), axis=-1)
    nll = -jnp.take_along_axis(
        logprobs, target[:, None].astype(jnp.int32), axis=-1)[:, 0]
    smooth = -jnp.mean(logprobs, axis=-1)
    return jnp.mean(confidence * nll + smoothing * smooth)


if __name__ == "__main__":
    key = jax.random.PRNGKey(0)
    kx, kt = jax.random.split(key)

    # Small demo shapes: ragged batch (20 rows, tile of 8 -> grid of 3 with a
    # padded last tile) over 32 classes, to exercise tiling + row masking.
    B, C = 20, 32
    smoothing = 0.1

    x = jax.random.normal(kx, (B, C), dtype=jnp.float32)
    target = jax.random.randint(kt, (B,), 0, C, dtype=jnp.int32)

    loss = label_smoothing_loss(x, target, smoothing=smoothing, block_rows=8)
    jax.block_until_ready(loss)

    ref = _reference(x, target, smoothing=smoothing)
    assert jnp.allclose(loss, ref, atol=1e-5, rtol=1e-5), (loss, ref)

    print("KERNEL_OK")
</pallas_src>

<mosaic_0001>
module attributes {stable_mosaic.version = 11 : i64} {
  func.func @_label_smoothing_kernel(%arg0: i32, %arg1: memref<8x32xf32, #tpu.memory_space<vmem>>, %arg2: memref<8x1xi32, #tpu.memory_space<vmem>>, %arg3: memref<1x128xf32, #tpu.memory_space<vmem>>) attributes {dimension_semantics = [#tpu.dimension_semantics<parallel>], iteration_bounds = array<i64: 3>, scalar_prefetch = 0 : i64, scratch_operands = 0 : i64, tpu.core_type = #tpu.core_type<tc>, window_params = [{transform_indices = @transform_0, window_bounds = array<i64: 8, 32>}, {transform_indices = @transform_1, window_bounds = array<i64: 8, 1>}, {transform_indices = @transform_2, window_bounds = array<i64: 1, 128>}]} {
    %c0 = arith.constant 0 : index
    %c0_0 = arith.constant 0 : index
    %0 = vector.load %arg1[%c0, %c0_0] : memref<8x32xf32, #tpu.memory_space<vmem>>, vector<8x32xf32>
    %c0_1 = arith.constant 0 : index
    %c0_2 = arith.constant 0 : index
    %1 = vector.load %arg2[%c0_1, %c0_2] : memref<8x1xi32, #tpu.memory_space<vmem>>, vector<8x1xi32>
    %cst = arith.constant dense<0xFF800000> : vector<8xf32>
    %2 = vector.multi_reduction <maximumf>, %0, %cst [1] : vector<8x32xf32> to vector<8xf32>
    %3 = vector.shape_cast %2 : vector<8xf32> to vector<8x1xf32>
    %4 = vector.broadcast %3 : vector<8x1xf32> to vector<8x32xf32>
    %5 = arith.subf %0, %4 : vector<8x32xf32>
    %6 = math.exp %5 : vector<8x32xf32>
    %cst_3 = arith.constant dense<0.000000e+00> : vector<8xf32>
    %7 = vector.multi_reduction <add>, %6, %cst_3 [1] : vector<8x32xf32> to vector<8xf32>
    %8 = vector.shape_cast %7 : vector<8xf32> to vector<8x1xf32>
    %9 = math.log %8 : vector<8x1xf32>
    %10 = arith.addf %3, %9 : vector<8x1xf32>
    %11 = tpu.iota {dimensions = array<i32: 1>} : vector<8x32xi32>
    %12 = vector.broadcast %1 : vector<8x1xi32> to vector<8x32xi32>
    %13 = arith.cmpi eq, %11, %12 : vector<8x32xi32>
    %14 = arith.extui %13 : vector<8x32xi1> to vector<8x32xi32>
    %15 = arith.sitofp %14 : vector<8x32xi32> to vector<8x32xf32>
    %16 = arith.mulf %0, %15 : vector<8x32xf32>
    %cst_4 = arith.constant dense<0.000000e+00> : vector<8xf32>
    %17 = vector.multi_reduction <add>, %16, %cst_4 [1] : vector<8x32xf32> to vector<8xf32>
    %18 = vector.shape_cast %17 : vector<8xf32> to vector<8x1xf32>
    %cst_5 = arith.constant dense<0.000000e+00> : vector<8xf32>
    %19 = vector.multi_reduction <add>, %0, %cst_5 [1] : vector<8x32xf32> to vector<8xf32>
    %20 = vector.shape_cast %19 : vector<8xf32> to vector<8x1xf32>
    %cst_6 = arith.constant 0.899999976 : f32
    %21 = vector.broadcast %cst_6 : f32 to vector<8x1xf32>
    %22 = arith.mulf %21, %18 : vector<8x1xf32>
    %23 = arith.subf %10, %22 : vector<8x1xf32>
    %cst_7 = arith.constant 3.125000e-03 : f32
    %24 = vector.broadcast %cst_7 : f32 to vector<8x1xf32>
    %25 = arith.mulf %24, %20 : vector<8x1xf32>
    %26 = arith.subf %23, %25 : vector<8x1xf32>
    %c8_i32 = arith.constant 8 : i32
    %27 = arith.muli %arg0, %c8_i32 : i32
    %28 = tpu.iota {dimensions = array<i32: 0>} : vector<8x1xi32>
    %29 = vector.broadcast %27 : i32 to vector<8x1xi32>
    %30 = arith.addi %29, %28 : vector<8x1xi32>
    %c20_i32 = arith.constant 20 : i32
    %31 = vector.broadcast %c20_i32 : i32 to vector<8x1xi32>
    %32 = arith.cmpi slt, %30, %31 : vector<8x1xi32>
    %cst_8 = arith.constant 0.000000e+00 : f32
    %33 = vector.broadcast %cst_8 : f32 to vector<8x1xf32>
    %34 = arith.select %32, %26, %33 : vector<8x1xi1>, vector<8x1xf32>
    %35 = vector.shape_cast %34 : vector<8x1xf32> to vector<1x8x1xf32>
    %cst_9 = arith.constant dense<0.000000e+00> : vector<1xf32>
    %36 = vector.multi_reduction <add>, %35, %cst_9 [1, 2] : vector<1x8x1xf32> to vector<1xf32>
    %37 = vector.shape_cast %36 : vector<1xf32> to vector<1x1x1xf32>
    %38 = vector.extract %37[0, 0, 0] : f32 from vector<1x1x1xf32>
    %39 = vector.broadcast %38 : f32 to vector<1x128xf32>
    %c0_10 = arith.constant 0 : index
    %c0_11 = arith.constant 0 : index
    %40 = vector.load %arg3[%c0_10, %c0_11] : memref<1x128xf32, #tpu.memory_space<vmem>>, vector<1x128xf32>
    tpu.vector_store %arg3[%c0_10, %c0_11], %39 {strides = array<i32>} : memref<1x128xf32, #tpu.memory_space<vmem>>, vector<1x128xf32>,
    return
  }
  func.func @transform_0(%arg0: i32) -> (i32, i32) {
    %c0_i32 = arith.constant 0 : i32
    %c0_i32_0 = arith.constant 0 : i32
    return %arg0, %c0_i32 : i32, i32
  }
  func.func @transform_1(%arg0: i32) -> (i32, i32) {
    %c0_i32 = arith.constant 0 : i32
    %c0_i32_0 = arith.constant 0 : i32
    return %arg0, %c0_i32 : i32, i32
  }
  func.func @transform_2(%arg0: i32) -> (i32, i32) {
    %c0_i32 = arith.constant 0 : i32
    %c0_i32_0 = arith.constant 0 : i32
    return %c0_i32, %arg0 : i32, i32
  }
}

</mosaic_0001>

<llo_original>
// kernel: tpu_custom_call.1
$region0: #{tpu_custom_call.1}
  #allocation0 [shape = 'u32[]', space=smem, size = 0x4, offset = 0x4, fixed_abs, tag = 'smem constant byte address 0x4 - core index']
  #allocation1 [shape = 'u32[144,128]{1,0:T(1,128)}', space=vmem, size = 0x12000, scoped, tag = 'internal scratch']
  %s0 = inlined_call_operand.vmem [shape: f32[24,32], index: 0, kind: input, shape index: {}]
  %s1 = inlined_call_operand.vmem [shape: s32[24,1], index: 1, kind: input, shape index: {}]
  %s2 = inlined_call_operand.hbm [shape: f32[1,384], index: 2, kind: output, shape index: {}]
  %s3 = sld [smem:[#allocation0]]
  $region41: #{tpu_custom_call.1} parent=0
    _
  %s5 = ssub.s32 1, %s3
  %s6 = scalar_select 0, %s5, %s3
  $region1: #{tpu_custom_call.1} parent=0
    #allocation2 [shape = 'u8[1024]{0}', space=vmem, size = 0x400, scoped, tag = 'output window, operand 0']
    #allocation3 [shape = 's32[2]{0}', space=sflag, size = 0x8, scoped, tag = 'scoped memory for tpu_custom_call.1']
    %7 = vsyncpa [#allocation3], 0
    %s8 = scalar_lea.sflag [#allocation3], 1
    %9 = vsyncpa %s8, 0
    loop: start=0, step=1, limit=5
    $region2: #{tpu_custom_call.1} parent=1 // loop_pre_header
      _
    $region3: #{tpu_custom_call.1} parent=1 // loop_header
      %s11 = sphi 0, %s15
      %p12 = scmp.ge.s32.totalorder %s11, 5
      %s21 = sphi 0, %s23
      %s24 = sphi 0, %s21
      %s25 = sphi 0, %s24
      %s41 = sphi 0, %s25
      %s47 = sphi 0, %s49
      %s50 = sphi 0, %s47
      %s51 = sphi 0, %s50
      %s67 = sphi 0, %s51
      %s73 = sphi 0, %s75
      %s76 = sphi 0, %s73
      %s77 = sphi 0, %s76
      %s93 = sphi 0, %s77
    $region4: #{tpu_custom_call.1} parent=1 // loop_header_branch
      %14 = sbr.rel (%p12) target = $region8
    $region5: #{tpu_custom_call.1} parent=1 // loop_body
      %s16 = ssub.s32 %s11, 1
      %s17 = ssub.s32 %s11, 2
      %s18 = sadd.s32 %s11, 1
      %s19 = ssub.s32 %s11, %s18
      %p20 = scmp.eq.s32.totalorder %s19, 0
      %s22 = sadd.s32 %s21, 1
      %s23 = scalar_select %p20, %s21, %s22
      %p26 = pneg %p20
      %p27 = scmp.eq.s32.totalorder %s11, 2
      %p28 = por %p26, %p27
      %p29 = scmp.ne.s32.totalorder %s21, %s24
      %p30 = scmp.eq.s32.totalorder %s11, 0
      %p31 = por %p29, %p30
      %p32 = scmp.ne.s32.totalorder %s21, %s24
      %p33 = scmp.eq.s32.totalorder %s16, 2
      %p34 = por %p32, %p33
      %p35 = scmp.ne.s32.totalorder %s24, %s25
      %p36 = scmp.eq.s32.totalorder %s16, 0
      %p37 = por %p35, %p36
      %p38 = scmp.ne.s32.totalorder %s24, %s25
      %p39 = scmp.eq.s32.totalorder %s17, 2
      %p40 = por %p38, %p39
      %p42 = scmp.ne.s32.totalorder %s25, %s41
      %p43 = scmp.eq.s32.totalorder %s17, 0
      %p44 = por %p42, %p43
      %s45 = ssub.s32 %s11, %s18
      %p46 = scmp.eq.s32.totalorder %s45, 0
      %s48 = sadd.s32 %s47, 1
      %s49 = scalar_select %p46, %s47, %s48
      %p52 = pneg %p46
      %p53 = scmp.eq.s32.totalorder %s11, 2
      %p54 = por %p52, %p53
      %p55 = scmp.ne.s32.totalorder %s47, %s50
      %p56 = scmp.eq.s32.totalorder %s11, 0
      %p57 = por %p55, %p56
      %p58 = scmp.ne.s32.totalorder %s47, %s50
      %p59 = scmp.eq.s32.totalorder %s16, 2
      %p60 = por %p58, %p59
      %p61 = scmp.ne.s32.totalorder %s50, %s51
      %p62 = scmp.eq.s32.totalorder %s16, 0
      %p63 = por %p61, %p62
      %p64 = scmp.ne.s32.totalorder %s50, %s51
      %p65 = scmp.eq.s32.totalorder %s17, 2
      %p66 = por %p64, %p65
      %p68 = scmp.ne.s32.totalorder %s51, %s67
      %p69 = scmp.eq.s32.totalorder %s17, 0
      %p70 = por %p68, %p69
      %s71 = ssub.s32 %s11, %s18
      %p72 = scmp.eq.s32.totalorder %s71, 0
      %s74 = sadd.s32 %s73, 1
      %s75 = scalar_select %p72, %s73, %s74
      %p78 = pneg %p72
      %p79 = scmp.eq.s32.totalorder %s11, 2
      %p80 = por %p78, %p79
      %p81 = scmp.ne.s32.totalorder %s73, %s76
      %p82 = scmp.eq.s32.totalorder %s11, 0
      %p83 = por %p81, %p82
      %p84 = scmp.ne.s32.totalorder %s73, %s76
      %p85 = scmp.eq.s32.totalorder %s16, 2
      %p86 = por %p84, %p85
      %p87 = scmp.ne.s32.totalorder %s76, %s77
      %p88 = scmp.eq.s32.totalorder %s16, 0
      %p89 = por %p87, %p88
      %p90 = scmp.ne.s32.totalorder %s76, %s77
      %p91 = scmp.eq.s32.totalorder %s17, 2
      %p92 = por %p90, %p91
      %p94 = scmp.ne.s32.totalorder %s77, %s93
      %p95 = scmp.eq.s32.totalorder %s17, 0
      %p96 = por %p94, %p95
      %p97 = scmp.le.s32.totalorder 1, %s11
      %p98 = scmp.lt.s32.totalorder %s11, 4
      %p99 = pnand %p97, %p98
      %p100 = pneg %p99
      // Predicated region
      $region9: #{tpu_custom_call.1} parent=5 // pred_check
        _
      $region10: #{tpu_custom_call.1} parent=5 // pred_check_branch
        %102 = sbr.rel (%p99) target = $region12
      $region11: #{tpu_custom_call.1} parent=5 // pred_region
        %s103 = ssub.s32 %s11, 1
      $region12: #{tpu_custom_call.1} parent=5 // pred_fallthru
        _
      %p104 = scmp.lt.s32.totalorder %s11, 3
      // Predicated region
      $region13: #{tpu_custom_call.1} parent=5 // pred_check
        %p105 = pneg %p104
      $region14: #{tpu_custom_call.1} parent=5 // pred_check_branch
        %107 = sbr.rel (%p105) target = $region16
      $region15: #{tpu_custom_call.1} parent=5 // pred_region
        // Predicated region
        $region17: #{tpu_custom_call.1} parent=15 // pred_check
          %p108 = pneg %p31
        $region18: #{tpu_custom_call.1} parent=15 // pred_check_branch
          %110 = sbr.rel (%p108) target = $region20
        $region19: #{tpu_custom_call.1} parent=15 // pred_region
          %p111 = scmp.lt.s32.totalorder %s11, 2
          %s112 = scalar_select %p111, %s11, 2
          %s113 = smul.addr %s112, 8
          %s114 = scalar_lea.vmem %s0, %s113
        $region20: #{tpu_custom_call.1} parent=15 // pred_fallthru
          _
        // Predicated region
        $region21: #{tpu_custom_call.1} parent=15 // pred_check
          %p115 = pneg %p57
        $region22: #{tpu_custom_call.1} parent=15 // pred_check_branch
          %117 = sbr.rel (%p115) target = $region24
        $region23: #{tpu_custom_call.1} parent=15 // pred_region
          %p118 = scmp.lt.s32.totalorder %s11, 2
          %s119 = scalar_select %p118, %s11, 2
          %s120 = smul.addr %s119, 8
          %s121 = scalar_lea.vmem %s1, %s120
        $region24: #{tpu_custom_call.1} parent=15 // pred_fallthru
          _
      $region16: #{tpu_custom_call.1} parent=5 // pred_fallthru
        _
      %p122 = scmp.le.s32.totalorder 1, %s11
      %p123 = scmp.lt.s32.totalorder %s11, 4
      %p124 = pnand %p122, %p123
      %p125 = pneg %p124
      // Predicated region
      $region25: #{tpu_custom_call.1} parent=5 // pred_check
        _
      $region26: #{tpu_custom_call.1} parent=5 // pred_check_branch
        %127 = sbr.rel (%p124) target = $region28
      $region27: #{tpu_custom_call.1} parent=5 // pred_region
        %s128 = ssub.s32 %s11, 1
        %p129 = scmp.lt.s32.totalorder %s16, 2
        %s130 = scalar_select %p129, %s16, 2
        %s131 = smul.addr %s130, 8
        %s132 = scalar_lea.vmem %s0, %s131
        %p133 = pneg %p37
        %p134 = pneg %p34
        %p135 = scmp.lt.s32.totalorder %s16, 2
        %s136 = scalar_select %p135, %s16, 2
        %s137 = smul.addr %s136, 8
        %s138 = scalar_lea.vmem %s1, %s137
        %p139 = pneg %p63
        %p140 = pneg %p60
        %p141 = pneg %p89
        %p142 = pneg %p86
        %s143 = sand.u32 %s76, 1
        %s144 = scalar_lea.sflag [#allocation3], %s143
        %s145 = sand.u32 %s76, 1
        %s146 = scalar_lea.vmem [#allocation2], %s145
        %p147 = scmp.lt.s32.totalorder %s16, 2
        %s148 = scalar_select %p147, %s16, 2
        %s149 = smul.addr %s148, 8
        %s150 = scalar_lea.vmem %s0, %s149
        %p151 = scmp.lt.s32.totalorder %s16, 2
        %s152 = scalar_select %p151, %s16, 2
        %s153 = smul.addr %s152, 8
        %s154 = scalar_lea.vmem %s1, %s153
        %v155 = vld [vmem:[%s150] sm:$0xff]
        %v156 = vld [vmem:[%s154] sm:$0xff]
        %vm157 = vcmask 261120
        %v158 = vsel %vm157, %v155, -inf
        %159 = vmax.xlane.f32.xlu0 %v158
        %v160 = vpop.xlane.xlu0 %159
        %v161 = vsub.f32 %v155, %v160
        %v162 = vmul.f32 %v161, 1.442695
        %v163 = vpow.pop %v162
        %v164 = vsel %vm157, %v163, 0.0
        %165 = vadd.xlane.f32.xlu0 %v164
        %v166 = vpop.xlane.xlu0 %165
        %v167 = vlog2.pop %v166
        %v168 = vmul.f32 %v167, 0.6931472
        %v169 = vadd.f32 %v160, %v168
        %v170 = vlaneseq
        %v171 = vand.u32 %v170, 127
        %172 = vset.pattern.permute.xlu0 0
        %173 = vperm.xlu0 %172, %v156
        %v174 = vpop.permute.xlu0 %173
        %vm175 = vcmp.eq.s32.totalorder %v171, %v174
        %v176 = vsel %vm175, 1, 0
        %v177 = vcvt.s32.f32 %v176
        %v178 = vmul.f32 %v155, %v177
        %v179 = vsel %vm157, %v178, 0.0
        %180 = vadd.xlane.f32.xlu0 %v179
        %v181 = vpop.xlane.xlu0 %180
        %v182 = vsel %vm157, %v155, 0.0
        %183 = vadd.xlane.f32.xlu0 %v182
        %v184 = vpop.xlane.xlu0 %183
        %v185 = vmul.f32 %v181, 0.9
        %v186 = vsub.f32 %v169, %v185
        %v187 = vmul.f32 %v184, 0.003125
        %v188 = vsub.f32 %v186, %v187
        %s189 = smul.u32 %s16, 8
        %v190 = vlaneseq
        %v191 = vshrl.u32 %v190, 7
        %v192 = vstv %s189
        %v193 = vadd.s32 %v192, %v191
        %vm194 = vcmp.lt.s32.totalorder %v193, 20
        %v195 = vsel %vm194, %v188, 0.0
        %vm196 = vcmask 7168
        %v197 = vsel %vm196, %v195, 0.0
        %198 = vadd.xlane.f32.xlu0 %v197
        %v199 = vpop.xlane.xlu0 %198
        %v200 = vrot.slane %v199, 4
        %v201 = vadd.f32 %v199, %v200
        %v202 = vrot.slane %v201, 2
        %v203 = vadd.f32 %v201, %v202
        %v204 = vrot.slane %v203, 1
        %v205 = vadd.f32 %v203, %v204
        %s206 = vtos %v205
        %v207 = vstv %s206
        %208 = vst [vmem:[%s146] sm:$0x1] %v207
        %s209 = sand.u32 %s76, 1
        %s210 = scalar_lea.sflag [#allocation3], %s209
        %s211 = sand.u32 %s76, 1
        %s212 = scalar_lea.vmem [#allocation2], %s211
        // Predicated region
        $region29: #{tpu_custom_call.1} parent=27 // pred_check
          %p213 = pneg %p86
        $region30: #{tpu_custom_call.1} parent=27 // pred_check_branch
          %215 = sbr.rel (%p213) target = $region32
        $region31: #{tpu_custom_call.1} parent=27 // pred_region
          %s217 = ssub.s32 16, 16
          %218 = vsyncadd %s210, %s217
          %s219 = smul.addr %s16, 16
          %s220 = scalar_lea.hbm %s2, %s219
          %s222 = sshll.u32 %s212, 4
          %s223 = int_to_ptr.vmem [resolvable:$true] %s222
          %225 = dma.vmem_to_hbm [thread:$0]  %s223, 16, %s220, %s210
        $region32: #{tpu_custom_call.1} parent=27 // pred_fallthru
          _
      $region28: #{tpu_custom_call.1} parent=5 // pred_fallthru
        _
      %p226 = scmp.le.s32.totalorder 2, %s11
      // Predicated region
      $region33: #{tpu_custom_call.1} parent=5 // pred_check
        %p227 = pneg %p226
      $region34: #{tpu_custom_call.1} parent=5 // pred_check_branch
        %229 = sbr.rel (%p227) target = $region36
      $region35: #{tpu_custom_call.1} parent=5 // pred_region
        %s230 = ssub.s32 %s11, 2
        // Predicated region
        $region37: #{tpu_custom_call.1} parent=35 // pred_check
          %p231 = pneg %p92
        $region38: #{tpu_custom_call.1} parent=35 // pred_check_branch
          %233 = sbr.rel (%p231) target = $region40
        $region39: #{tpu_custom_call.1} parent=35 // pred_region
          %s234 = sand.u32 %s77, 1
          %s235 = scalar_lea.sflag [#allocation3], %s234
          %s236 = sand.u32 %s77, 1
          %s237 = scalar_lea.vmem [#allocation2], %s236
          %238 = dma.done %s235, 16
        $region40: #{tpu_custom_call.1} parent=35 // pred_fallthru
          _
      $region36: #{tpu_custom_call.1} parent=5 // pred_fallthru
        _
    $region6: #{tpu_custom_call.1} parent=1 // loop_footer
      %s15 = sadd.s32 1, %s11
    $region7: #{tpu_custom_call.1} parent=1 // loop_footer_branch
      %10 = sbr.rel target = $region3
    $region8: #{tpu_custom_call.1} parent=1 // loop_exit
      _
    %239 = vsyncpa [#allocation3], 1
    %s240 = scalar_lea.sflag [#allocation3], 1
    %241 = vsyncpa %s240, 1

</llo_original>
